<compile_context>
chip_gen: v6e
topology: v6e:2x2x1
jax: 0.10.0
libtpu: 0.0.40
codegen_flags: <defaults>
</compile_context>

<pallas_src>
import jax
import jax.numpy as jnp
from jax.experimental import pallas as pl
from jax.experimental.pallas import tpu as pltpu


def _round_up(x, m):
    return ((x + m - 1) // m) * m


# ----------------------------------------------------------------------------
# Kernel factory: whole forward pass for one batch tile.  All weights live
# fully in VMEM (largest is 256x128 bf16 = 64 KiB); only the batch axis is
# tiled.  `n_chunks` independent row sub-chunks are traced in the same basic
# block so the scheduler can interleave their MXU / VPU work.
# ----------------------------------------------------------------------------
def make_d3qn_kernel(tile, n_chunks):
    chunk = tile // n_chunks

    def kernel(obs_ref,
               w1_ref, w2_ref, w3_ref, w4_ref, wh_ref, wq_ref,
               b_ref,            # (6, 256) f32: one bias row per layer
               q_ref):

        def linear(h, w_ref, bias_row):
            n = w_ref.shape[1]
            return (jnp.dot(h, w_ref[...], preferred_element_type=jnp.float32)
                    + b_ref[bias_row:bias_row + 1, :n])

        def relu_bf16(x):
            return jnp.maximum(x, 0.0).astype(jnp.bfloat16)

        # Static python loop -> fully unrolled into one basic block; the two
        # chunks are independent, letting the LLO scheduler fill MXU bubbles.
        for c in range(n_chunks):
            rows = pl.ds(c * chunk, chunk)
            x = obs_ref[rows, :]                         # (chunk, in_dim) bf16

            # hidden = Linear->ReLU x4 (the trailing duplicate ReLU in the
            # torch Sequential is a no-op after a ReLU, so it is omitted).
            h = relu_bf16(linear(x, w1_ref, 0))          # (chunk, 64)
            h = relu_bf16(linear(h, w2_ref, 1))          # (chunk, 128)
            h = relu_bf16(linear(h, w3_ref, 2))          # (chunk, 256)
            h = relu_bf16(linear(h, w4_ref, 3))          # (chunk, 64)

            # fused dueling heads: one matmul producing hv || ha, then one
            # matmul whose weight already encodes q = v + a - mean(a)
            # (built in prepare_params), padded to 128 lanes.
            hva = relu_bf16(linear(h, wh_ref, 4))        # (chunk, 64)
            q = linear(hva, wq_ref, 5)                   # (chunk, 128) f32

            q_ref[rows, :] = q.astype(q_ref.dtype)

    return kernel


# ----------------------------------------------------------------------------
# One-time parameter preparation (hoisted out of the forward path):
#   * fuse fc_h_v / fc_h_a into one (64, 64) matmul,
#   * fold the dueling combine into the final weight:
#       q = hv @ Wv @ 1_A^T + bv 1^T + (ha @ Wa + ba) @ (I_A - 11^T/A)
#   * zero-pad the final weight/bias to 128 output lanes (lane-dense store),
#   * cast MXU operands to bf16, bundle all biases into one (6, 256) array.
# ----------------------------------------------------------------------------
def prepare_params(params):
    n_actions = params["wa"].shape[1]
    a_pad = _round_up(n_actions, 128)

    # fused hidden heads
    wh = jnp.concatenate([params["whv"], params["wha"]], axis=1)   # (64, 64)
    bh = jnp.concatenate([params["bhv"], params["bha"]], axis=1)   # (1, 64)

    # algebraic dueling fold
    ones = jnp.ones((1, n_actions), jnp.float32)
    m = jnp.eye(n_actions, dtype=jnp.float32) - jnp.ones(
        (n_actions, n_actions), jnp.float32) / n_actions
    wq = jnp.concatenate([params["wv"] @ ones, params["wa"] @ m], axis=0)
    bq = params["bv"] @ ones + params["ba"] @ m                    # (1, A)

    # lane-dense padding of the output head
    wq = jnp.pad(wq, ((0, 0), (0, a_pad - n_actions)))             # (64, 128)
    bq = jnp.pad(bq, ((0, 0), (0, a_pad - n_actions)))             # (1, 128)

    weights = [params["w1"], params["w2"], params["w3"], params["w4"], wh, wq]
    biases = [params["b1"], params["b2"], params["b3"], params["b4"], bh, bq]

    bw = max(max(b.shape[1] for b in biases), 128)
    b_all = jnp.concatenate(
        [jnp.pad(b, ((0, 0), (0, bw - b.shape[1]))) for b in biases], axis=0)

    return {
        "weights": tuple(w.astype(jnp.bfloat16) for w in weights),
        "b_all": b_all.astype(jnp.float32),
        "n_actions": n_actions,
    }


# ----------------------------------------------------------------------------
# Forward wrapper
# ----------------------------------------------------------------------------
def d3qn_forward(obs, prep, *, batch_tile=2048):
    B, in_dim = obs.shape
    weights = prep["weights"]
    b_all = prep["b_all"]
    n_actions = prep["n_actions"]
    a_pad = weights[-1].shape[1]

    obs_bf = obs.astype(jnp.bfloat16)

    # Batch tiling: a single grid step whenever B fits (tile multiple of 16
    # for bf16 sublane packing); larger batches use batch_tile-row steps so
    # the "parallel" batch axis can be split across v7x's two TensorCores.
    if B <= batch_tile:
        tile = _round_up(max(B, 16), 16)
    else:
        tile = _round_up(batch_tile, 32)
    B_pad = _round_up(B, tile)
    if B_pad != B:
        obs_bf = jnp.pad(obs_bf, ((0, B_pad - B), (0, 0)))
    grid = (B_pad // tile,)

    # Interleave two independent sub-chunks when the tile is big enough for
    # each half to stay on bf16 sublane-packing boundaries (multiple of 16).
    n_chunks = 2 if (tile >= 32 and tile % 32 == 0) else 1

    in_specs = [pl.BlockSpec((tile, in_dim), lambda i: (i, 0))]
    args = [obs_bf]
    for w in weights:
        # constant block index -> each weight is DMA'd once and stays resident
        in_specs.append(pl.BlockSpec(w.shape, lambda i: (0, 0)))
        args.append(w)
    in_specs.append(pl.BlockSpec(b_all.shape, lambda i: (0, 0)))
    args.append(b_all)

    out_spec = pl.BlockSpec((tile, a_pad), lambda i: (i, 0))

    q = pl.pallas_call(
        make_d3qn_kernel(tile, n_chunks),
        out_shape=jax.ShapeDtypeStruct((B_pad, a_pad), jnp.float32),
        grid_spec=pl.GridSpec(grid=grid, in_specs=in_specs, out_specs=out_spec),
        compiler_params=pltpu.CompilerParams(
            dimension_semantics=("parallel",)),
    )(*args)
    return q[:B, :n_actions]


# ----------------------------------------------------------------------------
# Deterministic parameter init (torch.nn.Linear-style uniform bounds), stored
# transposed: W has shape (in_features, out_features).
# ----------------------------------------------------------------------------
def init_params(key, input_shape, n_actions):
    dims = [
        ("w1", input_shape, 64), ("w2", 64, 128), ("w3", 128, 256),
        ("w4", 256, 64),
        ("whv", 64, 32), ("wha", 64, 32),
        ("wv", 32, 1), ("wa", 32, n_actions),
    ]
    params = {}
    for name, fan_in, fan_out in dims:
        key, kw, kb = jax.random.split(key, 3)
        bound = 1.0 / jnp.sqrt(jnp.float32(fan_in))
        params[name] = jax.random.uniform(
            kw, (fan_in, fan_out), jnp.float32, -bound, bound)
        params["b" + name[1:]] = jax.random.uniform(
            kb, (1, fan_out), jnp.float32, -bound, bound)
    return params


# Reference mirrors the kernel precision pipeline (bf16 operands, f32 accum)
# with the original, unfused weights and the explicit dueling combine --
# validates both the head fusion and the algebraic fold of q = v+a-mean(a).
def d3qn_reference(obs, p):
    def lin(h, w, b):
        return jnp.dot(h.astype(jnp.bfloat16), w.astype(jnp.bfloat16),
                       preferred_element_type=jnp.float32) + b

    h = obs
    for wk, bk in [("w1", "b1"), ("w2", "b2"), ("w3", "b3"), ("w4", "b4")]:
        h = jnp.maximum(lin(h, p[wk], p[bk]), 0.0)
    hv = jnp.maximum(lin(h, p["whv"], p["bhv"]), 0.0)
    ha = jnp.maximum(lin(h, p["wha"], p["bha"]), 0.0)
    v = lin(hv, p["wv"], p["bv"])
    a = lin(ha, p["wa"], p["ba"])
    return v + a - jnp.mean(a, axis=-1, keepdims=True)


if __name__ == "__main__":
    key = jax.random.PRNGKey(0)
    B, input_shape, n_actions = 8, 32, 8

    key, kobs = jax.random.split(key)
    obs = jax.random.normal(kobs, (B, input_shape), jnp.float32)
    params = init_params(key, input_shape, n_actions)

    prep = prepare_params(params)           # one-time repack, outside fwd path
    q = d3qn_forward(obs, prep)
    q = jax.block_until_ready(q)

    q_ref = d3qn_reference(obs, params)
    assert q.shape == (B, n_actions)
    assert jnp.allclose(q, q_ref, atol=1e-2, rtol=1e-2), (
        float(jnp.max(jnp.abs(q - q_ref))))
    print("KERNEL_OK")
</pallas_src>

<mosaic_0001>
module attributes {stable_mosaic.version = 11 : i64} {
  func.func @kernel(%arg0: i32, %arg1: memref<16x32xbf16, #tpu.memory_space<vmem>>, %arg2: memref<32x64xbf16, #tpu.memory_space<vmem>>, %arg3: memref<64x128xbf16, #tpu.memory_space<vmem>>, %arg4: memref<128x256xbf16, #tpu.memory_space<vmem>>, %arg5: memref<256x64xbf16, #tpu.memory_space<vmem>>, %arg6: memref<64x64xbf16, #tpu.memory_space<vmem>>, %arg7: memref<64x128xbf16, #tpu.memory_space<vmem>>, %arg8: memref<6x256xf32, #tpu.memory_space<vmem>>, %arg9: memref<16x128xf32, #tpu.memory_space<vmem>>) attributes {dimension_semantics = [#tpu.dimension_semantics<parallel>], iteration_bounds = array<i64: 1>, scalar_prefetch = 0 : i64, scratch_operands = 0 : i64, tpu.core_type = #tpu.core_type<tc>, window_params = [{transform_indices = @transform_0, window_bounds = array<i64: 16, 32>}, {pipeline_mode = #tpu.pipeline_mode<synchronous>, transform_indices = @transform_1, window_bounds = array<i64: 32, 64>}, {pipeline_mode = #tpu.pipeline_mode<synchronous>, transform_indices = @transform_2, window_bounds = array<i64: 64, 128>}, {pipeline_mode = #tpu.pipeline_mode<synchronous>, transform_indices = @transform_3, window_bounds = array<i64: 128, 256>}, {pipeline_mode = #tpu.pipeline_mode<synchronous>, transform_indices = @transform_4, window_bounds = array<i64: 256, 64>}, {pipeline_mode = #tpu.pipeline_mode<synchronous>, transform_indices = @transform_5, window_bounds = array<i64: 64, 64>}, {pipeline_mode = #tpu.pipeline_mode<synchronous>, transform_indices = @transform_6, window_bounds = array<i64: 64, 128>}, {pipeline_mode = #tpu.pipeline_mode<synchronous>, transform_indices = @transform_7, window_bounds = array<i64: 6, 256>}, {transform_indices = @transform_8, window_bounds = array<i64: 16, 128>}]} {
    %c0 = arith.constant 0 : index
    %c0_0 = arith.constant 0 : index
    %0 = vector.load %arg1[%c0, %c0_0] : memref<16x32xbf16, #tpu.memory_space<vmem>>, vector<16x32xbf16>
    %c0_1 = arith.constant 0 : index
    %c0_2 = arith.constant 0 : index
    %1 = vector.load %arg2[%c0_1, %c0_2] : memref<32x64xbf16, #tpu.memory_space<vmem>>, vector<32x64xbf16>
    %cst = arith.constant dense<0.000000e+00> : vector<16x64xf32>
    %2 = tpu.matmul %0, %1, %cst {dimension_numbers = #tpu.dot_dimension_numbers<[1], [0], [0], [1], [0, 0, 1, 1], [], []>} : vector<16x32xbf16>, vector<32x64xbf16>, vector<16x64xf32> -> vector<16x64xf32>
    %c0_3 = arith.constant 0 : index
    %c0_4 = arith.constant 0 : index
    %3 = vector.load %arg8[%c0_3, %c0_4] : memref<6x256xf32, #tpu.memory_space<vmem>>, vector<1x64xf32>
    %4 = vector.broadcast %3 : vector<1x64xf32> to vector<16x64xf32>
    %5 = arith.addf %2, %4 : vector<16x64xf32>
    %cst_5 = arith.constant 0.000000e+00 : f32
    %6 = vector.broadcast %cst_5 : f32 to vector<16x64xf32>
    %7 = arith.maximumf %5, %6 : vector<16x64xf32>
    %8 = arith.truncf %7 : vector<16x64xf32> to vector<16x64xbf16>
    %c0_6 = arith.constant 0 : index
    %c0_7 = arith.constant 0 : index
    %9 = vector.load %arg3[%c0_6, %c0_7] : memref<64x128xbf16, #tpu.memory_space<vmem>>, vector<64x128xbf16>
    %cst_8 = arith.constant dense<0.000000e+00> : vector<16x128xf32>
    %10 = tpu.matmul %8, %9, %cst_8 {dimension_numbers = #tpu.dot_dimension_numbers<[1], [0], [0], [1], [0, 0, 1, 1], [], []>} : vector<16x64xbf16>, vector<64x128xbf16>, vector<16x128xf32> -> vector<16x128xf32>
    %c1 = arith.constant 1 : index
    %c0_9 = arith.constant 0 : index
    %11 = vector.load %arg8[%c1, %c0_9] : memref<6x256xf32, #tpu.memory_space<vmem>>, vector<1x128xf32>
    %12 = vector.broadcast %11 : vector<1x128xf32> to vector<16x128xf32>
    %13 = arith.addf %10, %12 : vector<16x128xf32>
    %cst_10 = arith.constant 0.000000e+00 : f32
    %14 = vector.broadcast %cst_10 : f32 to vector<16x128xf32>
    %15 = arith.maximumf %13, %14 : vector<16x128xf32>
    %16 = arith.truncf %15 : vector<16x128xf32> to vector<16x128xbf16>
    %c0_11 = arith.constant 0 : index
    %c0_12 = arith.constant 0 : index
    %17 = vector.load %arg4[%c0_11, %c0_12] : memref<128x256xbf16, #tpu.memory_space<vmem>>, vector<128x256xbf16>
    %cst_13 = arith.constant dense<0.000000e+00> : vector<16x256xf32>
    %18 = tpu.matmul %16, %17, %cst_13 {dimension_numbers = #tpu.dot_dimension_numbers<[1], [0], [0], [1], [0, 0, 1, 1], [], []>} : vector<16x128xbf16>, vector<128x256xbf16>, vector<16x256xf32> -> vector<16x256xf32>
    %c2 = arith.constant 2 : index
    %c0_14 = arith.constant 0 : index
    %19 = vector.load %arg8[%c2, %c0_14] : memref<6x256xf32, #tpu.memory_space<vmem>>, vector<1x256xf32>
    %20 = vector.broadcast %19 : vector<1x256xf32> to vector<16x256xf32>
    %21 = arith.addf %18, %20 : vector<16x256xf32>
    %cst_15 = arith.constant 0.000000e+00 : f32
    %22 = vector.broadcast %cst_15 : f32 to vector<16x256xf32>
    %23 = arith.maximumf %21, %22 : vector<16x256xf32>
    %24 = arith.truncf %23 : vector<16x256xf32> to vector<16x256xbf16>
    %c0_16 = arith.constant 0 : index
    %c0_17 = arith.constant 0 : index
    %25 = vector.load %arg5[%c0_16, %c0_17] : memref<256x64xbf16, #tpu.memory_space<vmem>>, vector<256x64xbf16>
    %cst_18 = arith.constant dense<0.000000e+00> : vector<16x64xf32>
    %26 = tpu.matmul %24, %25, %cst_18 {dimension_numbers = #tpu.dot_dimension_numbers<[1], [0], [0], [1], [0, 0, 1, 1], [], []>} : vector<16x256xbf16>, vector<256x64xbf16>, vector<16x64xf32> -> vector<16x64xf32>
    %c3 = arith.constant 3 : index
    %c0_19 = arith.constant 0 : index
    %27 = vector.load %arg8[%c3, %c0_19] : memref<6x256xf32, #tpu.memory_space<vmem>>, vector<1x64xf32>
    %28 = vector.broadcast %27 : vector<1x64xf32> to vector<16x64xf32>
    %29 = arith.addf %26, %28 : vector<16x64xf32>
    %cst_20 = arith.constant 0.000000e+00 : f32
    %30 = vector.broadcast %cst_20 : f32 to vector<16x64xf32>
    %31 = arith.maximumf %29, %30 : vector<16x64xf32>
    %32 = arith.truncf %31 : vector<16x64xf32> to vector<16x64xbf16>
    %c0_21 = arith.constant 0 : index
    %c0_22 = arith.constant 0 : index
    %33 = vector.load %arg6[%c0_21, %c0_22] : memref<64x64xbf16, #tpu.memory_space<vmem>>, vector<64x64xbf16>
    %cst_23 = arith.constant dense<0.000000e+00> : vector<16x64xf32>
    %34 = tpu.matmul %32, %33, %cst_23 {dimension_numbers = #tpu.dot_dimension_numbers<[1], [0], [0], [1], [0, 0, 1, 1], [], []>} : vector<16x64xbf16>, vector<64x64xbf16>, vector<16x64xf32> -> vector<16x64xf32>
    %c4 = arith.constant 4 : index
    %c0_24 = arith.constant 0 : index
    %35 = vector.load %arg8[%c4, %c0_24] : memref<6x256xf32, #tpu.memory_space<vmem>>, vector<1x64xf32>
    %36 = vector.broadcast %35 : vector<1x64xf32> to vector<16x64xf32>
    %37 = arith.addf %34, %36 : vector<16x64xf32>
    %cst_25 = arith.constant 0.000000e+00 : f32
    %38 = vector.broadcast %cst_25 : f32 to vector<16x64xf32>
    %39 = arith.maximumf %37, %38 : vector<16x64xf32>
    %40 = arith.truncf %39 : vector<16x64xf32> to vector<16x64xbf16>
    %c0_26 = arith.constant 0 : index
    %c0_27 = arith.constant 0 : index
    %41 = vector.load %arg7[%c0_26, %c0_27] : memref<64x128xbf16, #tpu.memory_space<vmem>>, vector<64x128xbf16>
    %cst_28 = arith.constant dense<0.000000e+00> : vector<16x128xf32>
    %42 = tpu.matmul %40, %41, %cst_28 {dimension_numbers = #tpu.dot_dimension_numbers<[1], [0], [0], [1], [0, 0, 1, 1], [], []>} : vector<16x64xbf16>, vector<64x128xbf16>, vector<16x128xf32> -> vector<16x128xf32>
    %c5 = arith.constant 5 : index
    %c0_29 = arith.constant 0 : index
    %43 = vector.load %arg8[%c5, %c0_29] : memref<6x256xf32, #tpu.memory_space<vmem>>, vector<1x128xf32>
    %44 = vector.broadcast %43 : vector<1x128xf32> to vector<16x128xf32>
    %45 = arith.addf %42, %44 : vector<16x128xf32>
    %c0_30 = arith.constant 0 : index
    %c0_31 = arith.constant 0 : index
    %46 = vector.load %arg9[%c0_30, %c0_31] : memref<16x128xf32, #tpu.memory_space<vmem>>, vector<16x128xf32>
    tpu.vector_store %arg9[%c0_30, %c0_31], %45 {strides = array<i32>} : memref<16x128xf32, #tpu.memory_space<vmem>>, vector<16x128xf32>,
    return
  }
  func.func @transform_0(%arg0: i32) -> (i32, i32) {
    %c0_i32 = arith.constant 0 : i32
    %c0_i32_0 = arith.constant 0 : i32
    return %arg0, %c0_i32 : i32, i32
  }
  func.func @transform_1(%arg0: i32) -> (i32, i32) {
    %c0_i32 = arith.constant 0 : i32
    %c0_i32_0 = arith.constant 0 : i32
    %c0_i32_1 = arith.constant 0 : i32
    return %c0_i32, %c0_i32_0 : i32, i32
  }
  func.func @transform_2(%arg0: i32) -> (i32, i32) {
    %c0_i32 = arith.constant 0 : i32
    %c0_i32_0 = arith.constant 0 : i32
    %c0_i32_1 = arith.constant 0 : i32
    return %c0_i32, %c0_i32_0 : i32, i32
  }
  func.func @transform_3(%arg0: i32) -> (i32, i32) {
    %c0_i32 = arith.constant 0 : i32
    %c0_i32_0 = arith.constant 0 : i32
    %c0_i32_1 = arith.constant 0 : i32
    return %c0_i32, %c0_i32_0 : i32, i32
  }
  func.func @transform_4(%arg0: i32) -> (i32, i32) {
    %c0_i32 = arith.constant 0 : i32
    %c0_i32_0 = arith.constant 0 : i32
    %c0_i32_1 = arith.constant 0 : i32
    return %c0_i32, %c0_i32_0 : i32, i32
  }
  func.func @transform_5(%arg0: i32) -> (i32, i32) {
    %c0_i32 = arith.constant 0 : i32
    %c0_i32_0 = arith.constant 0 : i32
    %c0_i32_1 = arith.constant 0 : i32
    return %c0_i32, %c0_i32_0 : i32, i32
  }
  func.func @transform_6(%arg0: i32) -> (i32, i32) {
    %c0_i32 = arith.constant 0 : i32
    %c0_i32_0 = arith.constant 0 : i32
    %c0_i32_1 = arith.constant 0 : i32
    return %c0_i32, %c0_i32_0 : i32, i32
  }
  func.func @transform_7(%arg0: i32) -> (i32, i32) {
    %c0_i32 = arith.constant 0 : i32
    %c0_i32_0 = arith.constant 0 : i32
    %c0_i32_1 = arith.constant 0 : i32
    return %c0_i32, %c0_i32_0 : i32, i32
  }
  func.func @transform_8(%arg0: i32) -> (i32, i32) {
    %c0_i32 = arith.constant 0 : i32
    %c0_i32_0 = arith.constant 0 : i32
    return %arg0, %c0_i32 : i32, i32
  }
}

</mosaic_0001>

<llo_original>
// kernel: tpu_custom_call.1
$region0: #{tpu_custom_call.1}
  #allocation0 [shape = 'u32[]', space=smem, size = 0x4, offset = 0x4, fixed_abs, tag = 'smem constant byte address 0x4 - core index']
  #allocation1 [shape = 'u32[144,128]{1,0:T(1,128)}', space=vmem, size = 0x12000, scoped, tag = 'internal scratch']
  %s0 = inlined_call_operand.hbm [shape: bf16[16,32], index: 0, kind: input, shape index: {}]
  %s1 = inlined_call_operand.hbm [shape: bf16[32,64], index: 1, kind: input, shape index: {}]
  %s2 = inlined_call_operand.vmem [shape: bf16[64,128], index: 2, kind: input, shape index: {}]
  %s3 = inlined_call_operand.vmem [shape: bf16[128,256], index: 3, kind: input, shape index: {}]
  %s4 = inlined_call_operand.vmem [shape: bf16[256,64], index: 4, kind: input, shape index: {}]
  %s5 = inlined_call_operand.vmem [shape: bf16[64,64], index: 5, kind: input, shape index: {}]
  %s6 = inlined_call_operand.hbm [shape: bf16[64,128], index: 6, kind: input, shape index: {}]
  %s7 = inlined_call_operand.hbm [shape: f32[6,256], index: 7, kind: input, shape index: {}]
  %s8 = inlined_call_operand.hbm [shape: f32[16,128], index: 8, kind: output, shape index: {}]
  %s9 = sld [smem:[#allocation0]]
  $region58: #{tpu_custom_call.1} parent=0
    _
  %s11 = ssub.s32 1, %s9
  %s12 = scalar_select 0, %s11, %s9
  $region1: #{tpu_custom_call.1} parent=0
    #allocation2 [shape = 'u8[4096]{0}', space=vmem, size = 0x1000, scoped, tag = 'input window, operand 0, single buffered']
    #allocation3 [shape = 's32[1]{0}', space=sflag, size = 0x4, scoped, tag = 'scoped memory for tpu_custom_call.1']
    #allocation4 [shape = 's32[1]{0}', space=sflag, size = 0x4, scoped, tag = 'scoped memory for tpu_custom_call.1']
    #allocation5 [shape = 'u8[8192]{0}', space=vmem, size = 0x2000, scoped, tag = 'input window, operand 1, single buffered']
    #allocation6 [shape = 's32[1]{0}', space=sflag, size = 0x4, scoped, tag = 'scoped memory for tpu_custom_call.1']
    #allocation7 [shape = 'u8[16384]{0}', space=vmem, size = 0x4000, scoped, tag = 'input window, operand 6, single buffered']
    #allocation8 [shape = 'u8[8192]{0}', space=vmem, size = 0x2000, scoped, tag = 'input window, operand 7, single buffered']
    #allocation9 [shape = 's32[1]{0}', space=sflag, size = 0x4, scoped, tag = 'scoped memory for tpu_custom_call.1']
    #allocation10 [shape = 'u8[8192]{0}', space=vmem, size = 0x2000, scoped, tag = 'output window, operand 0, single buffered']
    %13 = vsyncpa [#allocation3], 0
    %14 = vsyncpa [#allocation6], 0
    %15 = vsyncpa [#allocation9], 0
    %16 = vsyncpa [#allocation4], 0
    // Predicated region
    $region2: #{tpu_custom_call.1} parent=1 // pred_check
      _
    $region3: #{tpu_custom_call.1} parent=1 // pred_check_branch
      %18 = sbr.rel (0) target = $region5
    $region4: #{tpu_custom_call.1} parent=1 // pred_region
      %s20 = ssub.s32 128, 128
      %21 = vsyncadd [#allocation3], %s20
      %s22 = sshll.u32 [#allocation2], 4
      %s23 = int_to_ptr.vmem [resolvable:$true] %s22
      %28 = dma.hbm_to_vmem [thread:$0]  %s0, 128, %s23, [#allocation3], 64, 64, 4
    $region5: #{tpu_custom_call.1} parent=1 // pred_fallthru
      _
    // Predicated region
    $region6: #{tpu_custom_call.1} parent=1 // pred_check
      _
    $region7: #{tpu_custom_call.1} parent=1 // pred_check_branch
      %30 = sbr.rel (0) target = $region9
    $region8: #{tpu_custom_call.1} parent=1 // pred_region
      %s32 = ssub.s32 256, 256
      %33 = vsyncadd [#allocation6], %s32
      %s34 = sshll.u32 [#allocation5], 4
      %s35 = int_to_ptr.vmem [resolvable:$true] %s34
      %40 = dma.hbm_to_vmem [thread:$0]  %s1, 256, %s35, [#allocation6], 64, 64, 4
    $region9: #{tpu_custom_call.1} parent=1 // pred_fallthru
      _
    // Predicated region
    $region10: #{tpu_custom_call.1} parent=1 // pred_check
      _
    $region11: #{tpu_custom_call.1} parent=1 // pred_check_branch
      %42 = sbr.rel (0) target = $region13
    $region12: #{tpu_custom_call.1} parent=1 // pred_region
      _
    $region13: #{tpu_custom_call.1} parent=1 // pred_fallthru
      _
    // Predicated region
    $region14: #{tpu_custom_call.1} parent=1 // pred_check
      _
    $region15: #{tpu_custom_call.1} parent=1 // pred_check_branch
      %44 = sbr.rel (0) target = $region17
    $region16: #{tpu_custom_call.1} parent=1 // pred_region
      _
    $region17: #{tpu_custom_call.1} parent=1 // pred_fallthru
      _
    // Predicated region
    $region18: #{tpu_custom_call.1} parent=1 // pred_check
      _
    $region19: #{tpu_custom_call.1} parent=1 // pred_check_branch
      %46 = sbr.rel (0) target = $region21
    $region20: #{tpu_custom_call.1} parent=1 // pred_region
      _
    $region21: #{tpu_custom_call.1} parent=1 // pred_fallthru
      _
    // Predicated region
    $region22: #{tpu_custom_call.1} parent=1 // pred_check
      _
    $region23: #{tpu_custom_call.1} parent=1 // pred_check_branch
      %48 = sbr.rel (0) target = $region25
    $region24: #{tpu_custom_call.1} parent=1 // pred_region
      _
    $region25: #{tpu_custom_call.1} parent=1 // pred_fallthru
      _
    // Predicated region
    $region26: #{tpu_custom_call.1} parent=1 // pred_check
      _
    $region27: #{tpu_custom_call.1} parent=1 // pred_check_branch
      %50 = sbr.rel (0) target = $region29
    $region28: #{tpu_custom_call.1} parent=1 // pred_region
      %s52 = ssub.s32 512, 512
      %53 = vsyncadd [#allocation6], %s52
      %s54 = sshll.u32 [#allocation7], 4
      %s55 = int_to_ptr.vmem [resolvable:$true] %s54
      %60 = dma.hbm_to_vmem [thread:$0]  %s6, 512, %s55, [#allocation6], 64, 64, 4
    $region29: #{tpu_custom_call.1} parent=1 // pred_fallthru
      _
    // Predicated region
    $region30: #{tpu_custom_call.1} parent=1 // pred_check
      _
    $region31: #{tpu_custom_call.1} parent=1 // pred_check_branch
      %62 = sbr.rel (0) target = $region33
    $region32: #{tpu_custom_call.1} parent=1 // pred_region
      %s64 = ssub.s32 256, 256
      %65 = vsyncadd [#allocation9], %s64
      %s67 = sshll.u32 [#allocation8], 4
      %s68 = int_to_ptr.vmem [resolvable:$true] %s67
      %70 = dma.hbm_to_vmem [thread:$0]  %s7, 256, %s68, [#allocation9]
    $region33: #{tpu_custom_call.1} parent=1 // pred_fallthru
      _
    // Predicated region
    $region34: #{tpu_custom_call.1} parent=1 // pred_check
      _
    $region35: #{tpu_custom_call.1} parent=1 // pred_check_branch
      %72 = sbr.rel (0) target = $region37
    $region36: #{tpu_custom_call.1} parent=1 // pred_region
      %73 = dma.done [#allocation3], 128
    $region37: #{tpu_custom_call.1} parent=1 // pred_fallthru
      _
    // Predicated region
    $region38: #{tpu_custom_call.1} parent=1 // pred_check
      _
    $region39: #{tpu_custom_call.1} parent=1 // pred_check_branch
      %75 = sbr.rel (0) target = $region41
    $region40: #{tpu_custom_call.1} parent=1 // pred_region
      %76 = dma.done [#allocation6], 256
    $region41: #{tpu_custom_call.1} parent=1 // pred_fallthru
      _
    // Predicated region
    $region42: #{tpu_custom_call.1} parent=1 // pred_check
      _
    $region43: #{tpu_custom_call.1} parent=1 // pred_check_branch
      %78 = sbr.rel (0) target = $region45
    $region44: #{tpu_custom_call.1} parent=1 // pred_region
      %79 = dma.done [#allocation6], 512
    $region45: #{tpu_custom_call.1} parent=1 // pred_fallthru
      _
    // Predicated region
    $region46: #{tpu_custom_call.1} parent=1 // pred_check
      _
    $region47: #{tpu_custom_call.1} parent=1 // pred_check_branch
      %81 = sbr.rel (0) target = $region49
    $region48: #{tpu_custom_call.1} parent=1 // pred_region
      %82 = dma.done [#allocation9], 256
    $region49: #{tpu_custom_call.1} parent=1 // pred_fallthru
      _
    %v84 = vld [vmem:[#allocation2] sm:$0xf]
    %v85 = vld [vmem:[#allocation2 + $0x4] sm:$0xf]
    %v86 = vld [vmem:[#allocation5] sm:$0xf]
    %v87 = vld [vmem:[#allocation5 + $0x4] sm:$0xf]
    %v88 = vld [vmem:[#allocation5 + $0x8] sm:$0xf]
    %v89 = vld [vmem:[#allocation5 + $0xc] sm:$0xf]
    %v90 = vld [vmem:[#allocation8] ss:$0 sm:$0xff]
    %v93 = vunpack.c.l.b16 %v84
    %v94 = vunpack.c.l.b16 %v85
    %v95 = vpack.c.b16 %v94, %v93
    %v100 = vunpack.c.l.b16 %v86
    %v101 = vunpack.c.l.b16 %v87
    %v102 = vunpack.c.l.b16 %v88
    %v103 = vunpack.c.l.b16 %v89
    %v104 = vpack.c.b16 %v101, %v100
    %v105 = vpack.c.b16 %v103, %v102
    %vm108 = vcmask 261120
    %v110 = vsel %vm108, %v95, 0
    %112 = vmatprep.subr.bf16.mxu0 0
    %113 = vmatpush1.bf16.msra.mxu0 0
    %114 = vmatprep.subr.bf16.mxu0 0
    %115 = vmatpush1.bf16.msra.mxu0 0
    %116 = vmatprep.subr.bf16.mxu0 0
    %117 = vmatpush1.bf16.msra.mxu0 0
    %118 = vmatprep.subr.bf16.mxu0 0
    %119 = vmatpush1.bf16.msra.mxu0 0
    %120 = vmatprep.subr.bf16.mxu0 0
    %121 = vmatpush1.bf16.msra.mxu0 0
    %122 = vmatprep.subr.bf16.mxu0 0
    %123 = vmatpush1.bf16.msra.mxu0 0
    %124 = vmatprep.subr.bf16.mxu0 0
    %125 = vmatpush1.bf16.msra.mxu0 %v105
    %126 = vmatprep.subr.bf16.mxu0 0
    %127 = vmatpush1.bf16.msra.mxu0 %v104
    %128 = vmatprep.subr.bf16.mxu0 0
    %129 = vmatpush2.bf16.msra.mxu0 0
    %130 = vmatprep.subr.bf16.mxu0 0
    %131 = vmatpush2.bf16.msra.mxu0 0
    %132 = vmatprep.subr.bf16.mxu0 0
    %133 = vmatpush2.bf16.msra.mxu0 0
    %134 = vmatprep.subr.bf16.mxu0 0
    %135 = vmatpush2.bf16.msra.mxu0 0
    %136 = vmatprep.subr.bf16.mxu0 0
    %137 = vmatpush2.bf16.msra.mxu0 0
    %138 = vmatprep.subr.bf16.mxu0 0
    %139 = vmatpush2.bf16.msra.mxu0 0
    %140 = vmatprep.subr.bf16.mxu0 0
    %141 = vmatpush2.bf16.msra.mxu0 0
    %142 = vmatprep.subr.bf16.mxu0 0
    %143 = vmatpush2.bf16.msra.mxu0 0
    %144 = vmatprep.mubr.bf16.mxu0 0
    %145 = vmatmul.mubr.bf16.gmra.mxu0 %v110
    %v146 = vpop.f32.mrf.mxu0
    %v147 = vadd.f32 %v90, %v146
    %v148 = vpop.f32.mrf.mxu0
    %v149 = vpop.f32.mrf.mxu0
    %v150 = vadd.f32 %v90, %v149
    %v151 = vpop.f32.mrf.mxu0
    %152 = vdwg.mxu0
    %v153 = vmax.f32 %v147, 0.0
    %v154 = vmax.f32 %v150, 0.0
    %v155 = vpack.c.bf16 %v154, %v153
    %v156 = vld [vmem:[%s2] sm:$0xf]
    %v157 = vld [vmem:[%s2 + $0x4] sm:$0xf]
    %v158 = vld [vmem:[%s2 + $0x8] sm:$0xf]
    %v159 = vld [vmem:[%s2 + $0xc] sm:$0xf]
    %v160 = vld [vmem:[%s2 + $0x10] sm:$0xf]
    %v161 = vld [vmem:[%s2 + $0x14] sm:$0xf]
    %v162 = vld [vmem:[%s2 + $0x18] sm:$0xf]
    %v163 = vld [vmem:[%s2 + $0x1c] sm:$0xf]
    %v164 = vld [vmem:[#allocation8 + $0x1] ss:$0 sm:$0xff]
    %v173 = vunpack.c.l.b16 %v156
    %v174 = vunpack.c.l.b16 %v157
    %v175 = vunpack.c.l.b16 %v158
    %v176 = vunpack.c.l.b16 %v159
    %v177 = vunpack.c.l.b16 %v160
    %v178 = vunpack.c.l.b16 %v161
    %v179 = vunpack.c.l.b16 %v162
    %v180 = vunpack.c.l.b16 %v163
    %v181 = vpack.c.b16 %v174, %v173
    %v182 = vpack.c.b16 %v176, %v175
    %v183 = vpack.c.b16 %v178, %v177
    %v184 = vpack.c.b16 %v180, %v179
    %vm189 = vcmask 523264
    %v191 = vsel %vm189, %v155, 0
    %193 = vmatprep.subr.bf16.mxu0 0
    %194 = vmatpush1.bf16.msra.mxu0 0
    %195 = vmatprep.subr.bf16.mxu0 0
    %196 = vmatpush1.bf16.msra.mxu0 0
    %197 = vmatprep.subr.bf16.mxu0 0
    %198 = vmatpush1.bf16.msra.mxu0 0
    %199 = vmatprep.subr.bf16.mxu0 0
    %200 = vmatpush1.bf16.msra.mxu0 0
    %201 = vmatprep.subr.bf16.mxu0 0
    %202 = vmatpush1.bf16.msra.mxu0 %v184
    %203 = vmatprep.subr.bf16.mxu0 0
    %204 = vmatpush1.bf16.msra.mxu0 %v183
    %205 = vmatprep.subr.bf16.mxu0 0
    %206 = vmatpush1.bf16.msra.mxu0 %v182
    %207 = vmatprep.subr.bf16.mxu0 0
    %208 = vmatpush1.bf16.msra.mxu0 %v181
    %209 = vmatprep.subr.bf16.mxu0 0
    %210 = vmatpush2.bf16.msra.mxu0 0
    %211 = vmatprep.subr.bf16.mxu0 0
    %212 = vmatpush2.bf16.msra.mxu0 0
    %213 = vmatprep.subr.bf16.mxu0 0
    %214 = vmatpush2.bf16.msra.mxu0 0
    %215 = vmatprep.subr.bf16.mxu0 0
    %216 = vmatpush2.bf16.msra.mxu0 0
    %217 = vmatprep.subr.bf16.mxu0 0
    %218 = vmatpush2.bf16.msra.mxu0 0
    %219 = vmatprep.subr.bf16.mxu0 0
    %220 = vmatpush2.bf16.msra.mxu0 0
    %221 = vmatprep.subr.bf16.mxu0 0
    %222 = vmatpush2.bf16.msra.mxu0 0
    %223 = vmatprep.subr.bf16.mxu0 0
    %224 = vmatpush2.bf16.msra.mxu0 0
    %225 = vmatprep.mubr.bf16.mxu0 0
    %226 = vmatmul.mubr.bf16.gmra.mxu0 %v191
    %v227 = vpop.f32.mrf.mxu0
    %v228 = vadd.f32 %v164, %v227
    %v229 = vpop.f32.mrf.mxu0
    %v230 = vpop.f32.mrf.mxu0
    %v231 = vadd.f32 %v164, %v230
    %v232 = vpop.f32.mrf.mxu0
    %233 = vdwg.mxu0
    %v234 = vmax.f32 %v228, 0.0
    %v235 = vmax.f32 %v231, 0.0
    %v236 = vpack.c.bf16 %v235, %v234
    %v237 = vld [vmem:[%s3] sm:$0xff]
    %v238 = vld [vmem:[%s3 + $0x8] sm:$0xff]
    %v239 = vld [vmem:[%s3 + $0x10] sm:$0xff]
    %v240 = vld [vmem:[%s3 + $0x18] sm:$0xff]
    %v241 = vld [vmem:[%s3 + $0x20] sm:$0xff]
    %v242 = vld [vmem:[%s3 + $0x28] sm:$0xff]
    %v243 = vld [vmem:[%s3 + $0x30] sm:$0xff]
    %v244 = vld [vmem:[%s3 + $0x38] sm:$0xff]
    %v245 = vld [vmem:[%s3 + $0x40] sm:$0xff]
    %v246 = vld [vmem:[%s3 + $0x48] sm:$0xff]
    %v247 = vld [vmem:[%s3 + $0x50] sm:$0xff]
    %v248 = vld [vmem:[%s3 + $0x58] sm:$0xff]
    %v249 = vld [vmem:[%s3 + $0x60] sm:$0xff]
    %v250 = vld [vmem:[%s3 + $0x68] sm:$0xff]
    %v251 = vld [vmem:[%s3 + $0x70] sm:$0xff]
    %v252 = vld [vmem:[%s3 + $0x78] sm:$0xff]
    %s253 = scalar_lea.vmem [#allocation8], 2
    %v254 = vld [vmem:[%s253] ss:$8 sm:$0x3]
    %v256 = vlaneseq
    %v257 = vshrl.u32 %v256, 7
    %v258 = vsub.s32 0, %v257
    %v259 = vrot.slane %v254, %v258
    %v260 = vlaneseq
    %v261 = vshrl.u32 %v260, 7
    %v262 = vsub.s32 1, %v261
    %v263 = vrot.slane %v254, %v262
    %v282 = vunpack.c.l.b16 %v237
    %v283 = vunpack.c.h.b16 %v237
    %v284 = vunpack.c.l.b16 %v238
    %v285 = vunpack.c.h.b16 %v238
    %v286 = vunpack.c.l.b16 %v239
    %v287 = vunpack.c.h.b16 %v239
    %v288 = vunpack.c.l.b16 %v240
    %v289 = vunpack.c.h.b16 %v240
    %v290 = vunpack.c.l.b16 %v241
    %v291 = vunpack.c.h.b16 %v241
    %v292 = vunpack.c.l.b16 %v242
    %v293 = vunpack.c.h.b16 %v242
    %v294 = vunpack.c.l.b16 %v243
    %v295 = vunpack.c.h.b16 %v243
    %v296 = vunpack.c.l.b16 %v244
    %v297 = vunpack.c.h.b16 %v244
    %v298 = vunpack.c.l.b16 %v245
    %v299 = vunpack.c.h.b16 %v245
    %v300 = vunpack.c.l.b16 %v246
    %v301 = vunpack.c.h.b16 %v246
    %v302 = vunpack.c.l.b16 %v247
    %v303 = vunpack.c.h.b16 %v247
    %v304 = vunpack.c.l.b16 %v248
    %v305 = vunpack.c.h.b16 %v248
    %v306 = vunpack.c.l.b16 %v249
    %v307 = vunpack.c.h.b16 %v249
    %v308 = vunpack.c.l.b16 %v250
    %v309 = vunpack.c.h.b16 %v250
    %v310 = vunpack.c.l.b16 %v251
    %v311 = vunpack.c.h.b16 %v251
    %v312 = vunpack.c.l.b16 %v252
    %v313 = vunpack.c.h.b16 %v252
    %v314 = vpack.c.b16 %v284, %v282
    %v315 = vpack.c.b16 %v285, %v283
    %v316 = vpack.c.b16 %v288, %v286
    %v317 = vpack.c.b16 %v289, %v287
    %v318 = vpack.c.b16 %v292, %v290
    %v319 = vpack.c.b16 %v293, %v291
    %v320 = vpack.c.b16 %v296, %v294
    %v321 = vpack.c.b16 %v297, %v295
    %v322 = vpack.c.b16 %v300, %v298
    %v323 = vpack.c.b16 %v301, %v299
    %v324 = vpack.c.b16 %v304, %v302
    %v325 = vpack.c.b16 %v305, %v303
    %v326 = vpack.c.b16 %v308, %v306
    %v327 = vpack.c.b16 %v309, %v307
    %v328 = vpack.c.b16 %v312, %v310
    %v329 = vpack.c.b16 %v313, %v311
    %346 = vmatprep.subr.bf16.mxu0 %v329
    %347 = vmatpush1.bf16.msra.mxu0 %v328
    %348 = vmatprep.subr.bf16.mxu0 %v327
    %349 = vmatpush1.bf16.msra.mxu0 %v326
    %350 = vmatprep.subr.bf16.mxu0 %v325
    %351 = vmatpush1.bf16.msra.mxu0 %v324
    %352 = vmatprep.subr.bf16.mxu0 %v323
    %353 = vmatpush1.bf16.msra.mxu0 %v322
    %354 = vmatprep.subr.bf16.mxu0 %v321
    %355 = vmatpush1.bf16.msra.mxu0 %v320
    %356 = vmatprep.subr.bf16.mxu0 %v319
    %357 = vmatpush1.bf16.msra.mxu0 %v318
    %358 = vmatprep.subr.bf16.mxu0 %v317
    %359 = vmatpush1.bf16.msra.mxu0 %v316
    %360 = vmatprep.subr.bf16.mxu0 %v315
    %361 = vmatpush1.bf16.msra.mxu0 %v314
    %362 = vmatprep.subr.bf16.mxu0 0
    %363 = vmatpush2.bf16.msra.mxu0 0
    %364 = vmatprep.subr.bf16.mxu0 0
    %365 = vmatpush2.bf16.msra.mxu0 0
    %366 = vmatprep.subr.bf16.mxu0 0
    %367 = vmatpush2.bf16.msra.mxu0 0
    %368 = vmatprep.subr.bf16.mxu0 0
    %369 = vmatpush2.bf16.msra.mxu0 0
    %370 = vmatprep.subr.bf16.mxu0 0
    %371 = vmatpush2.bf16.msra.mxu0 0
    %372 = vmatprep.subr.bf16.mxu0 0
    %373 = vmatpush2.bf16.msra.mxu0 0
    %374 = vmatprep.subr.bf16.mxu0 0
    %375 = vmatpush2.bf16.msra.mxu0 0
    %376 = vmatprep.subr.bf16.mxu0 0
    %377 = vmatpush2.bf16.msra.mxu0 0
    %378 = vmatprep.mubr.bf16.mxu0 0
    %379 = vmatmul.mubr.bf16.gmra.mxu0 %v236
    %v380 = vpop.f32.mrf.mxu0
    %v381 = vadd.f32 %v259, %v380
    %v382 = vpop.f32.mrf.mxu0
    %v383 = vadd.f32 %v263, %v382
    %v384 = vpop.f32.mrf.mxu0
    %v385 = vadd.f32 %v259, %v384
    %v386 = vpop.f32.mrf.mxu0
    %v387 = vadd.f32 %v263, %v386
    %388 = vdwg.mxu0
    %v389 = vmax.f32 %v381, 0.0
    %v390 = vmax.f32 %v383, 0.0
    %v391 = vmax.f32 %v385, 0.0
    %v392 = vmax.f32 %v387, 0.0
    %v393 = vpack.c.bf16 %v391, %v389
    %v394 = vpack.c.bf16 %v392, %v390
    %v395 = vld [vmem:[%s4] sm:$0xf]
    %v396 = vld [vmem:[%s4 + $0x4] sm:$0xf]
    %v397 = vld [vmem:[%s4 + $0x8] sm:$0xf]
    %v398 = vld [vmem:[%s4 + $0xc] sm:$0xf]
    %v399 = vld [vmem:[%s4 + $0x10] sm:$0xf]
    %v400 = vld [vmem:[%s4 + $0x14] sm:$0xf]
    %v401 = vld [vmem:[%s4 + $0x18] sm:$0xf]
    %v402 = vld [vmem:[%s4 + $0x1c] sm:$0xf]
    %v403 = vld [vmem:[%s4 + $0x20] sm:$0xf]
    %v404 = vld [vmem:[%s4 + $0x24] sm:$0xf]
    %v405 = vld [vmem:[%s4 + $0x28] sm:$0xf]
    %v406 = vld [vmem:[%s4 + $0x2c] sm:$0xf]
    %v407 = vld [vmem:[%s4 + $0x30] sm:$0xf]
    %v408 = vld [vmem:[%s4 + $0x34] sm:$0xf]
    %v409 = vld [vmem:[%s4 + $0x38] sm:$0xf]
    %v410 = vld [vmem:[%s4 + $0x3c] sm:$0xf]
    %v411 = vld [vmem:[%s4 + $0x40] sm:$0xf]
    %v412 = vld [vmem:[%s4 + $0x44] sm:$0xf]
    %v413 = vld [vmem:[%s4 + $0x48] sm:$0xf]
    %v414 = vld [vmem:[%s4 + $0x4c] sm:$0xf]
    %v415 = vld [vmem:[%s4 + $0x50] sm:$0xf]
    %v416 = vld [vmem:[%s4 + $0x54] sm:$0xf]
    %v417 = vld [vmem:[%s4 + $0x58] sm:$0xf]
    %v418 = vld [vmem:[%s4 + $0x5c] sm:$0xf]
    %v419 = vld [vmem:[%s4 + $0x60] sm:$0xf]
    %v420 = vld [vmem:[%s4 + $0x64] sm:$0xf]
    %v421 = vld [vmem:[%s4 + $0x68] sm:$0xf]
    %v422 = vld [vmem:[%s4 + $0x6c] sm:$0xf]
    %v423 = vld [vmem:[%s4 + $0x70] sm:$0xf]
    %v424 = vld [vmem:[%s4 + $0x74] sm:$0xf]
    %v425 = vld [vmem:[%s4 + $0x78] sm:$0xf]
    %v426 = vld [vmem:[%s4 + $0x7c] sm:$0xf]
    %v427 = vld [vmem:[#allocation8 + $0x3] ss:$0 sm:$0xff]
    %v460 = vunpack.c.l.b16 %v395
    %v461 = vunpack.c.l.b16 %v396
    %v462 = vunpack.c.l.b16 %v397
    %v463 = vunpack.c.l.b16 %v398
    %v464 = vunpack.c.l.b16 %v399
    %v465 = vunpack.c.l.b16 %v400
    %v466 = vunpack.c.l.b16 %v401
    %v467 = vunpack.c.l.b16 %v402
    %v468 = vunpack.c.l.b16 %v403
    %v469 = vunpack.c.l.b16 %v404
    %v470 = vunpack.c.l.b16 %v405
    %v471 = vunpack.c.l.b16 %v406
    %v472 = vunpack.c.l.b16 %v407
    %v473 = vunpack.c.l.b16 %v408
    %v474 = vunpack.c.l.b16 %v409
    %v475 = vunpack.c.l.b16 %v410
    %v476 = vunpack.c.l.b16 %v411
    %v477 = vunpack.c.l.b16 %v412
    %v478 = vunpack.c.l.b16 %v413
    %v479 = vunpack.c.l.b16 %v414
    %v480 = vunpack.c.l.b16 %v415
    %v481 = vunpack.c.l.b16 %v416
    %v482 = vunpack.c.l.b16 %v417
    %v483 = vunpack.c.l.b16 %v418
    %v484 = vunpack.c.l.b16 %v419
    %v485 = vunpack.c.l.b16 %v420
    %v486 = vunpack.c.l.b16 %v421
    %v487 = vunpack.c.l.b16 %v422
    %v488 = vunpack.c.l.b16 %v423
    %v489 = vunpack.c.l.b16 %v424
    %v490 = vunpack.c.l.b16 %v425
    %v491 = vunpack.c.l.b16 %v426
    %v492 = vpack.c.b16 %v461, %v460
    %v493 = vpack.c.b16 %v463, %v462
    %v494 = vpack.c.b16 %v465, %v464
    %v495 = vpack.c.b16 %v467, %v466
    %v496 = vpack.c.b16 %v469, %v468
    %v497 = vpack.c.b16 %v471, %v470
    %v498 = vpack.c.b16 %v473, %v472
    %v499 = vpack.c.b16 %v475, %v474
    %v500 = vpack.c.b16 %v477, %v476
    %v501 = vpack.c.b16 %v479, %v478
    %v502 = vpack.c.b16 %v481, %v480
    %v503 = vpack.c.b16 %v483, %v482
    %v504 = vpack.c.b16 %v485, %v484
    %v505 = vpack.c.b16 %v487, %v486
    %v506 = vpack.c.b16 %v489, %v488
    %v507 = vpack.c.b16 %v491, %v490
    %524 = vmatprep.subr.bf16.mxu0 0
    %525 = vmatpush1.bf16.msra.mxu0 %v499
    %526 = vmatprep.subr.bf16.mxu0 0
    %527 = vmatpush1.bf16.msra.mxu0 %v498
    %528 = vmatprep.subr.bf16.mxu0 0
    %529 = vmatpush1.bf16.msra.mxu0 %v497
    %530 = vmatprep.subr.bf16.mxu0 0
    %531 = vmatpush1.bf16.msra.mxu0 %v496
    %532 = vmatprep.subr.bf16.mxu0 0
    %533 = vmatpush1.bf16.msra.mxu0 %v495
    %534 = vmatprep.subr.bf16.mxu0 0
    %535 = vmatpush1.bf16.msra.mxu0 %v494
    %536 = vmatprep.subr.bf16.mxu0 0
    %537 = vmatpush1.bf16.msra.mxu0 %v493
    %538 = vmatprep.subr.bf16.mxu0 0
    %539 = vmatpush1.bf16.msra.mxu0 %v492
    %540 = vmatprep.subr.bf16.mxu0 0
    %541 = vmatpush2.bf16.msra.mxu0 %v507
    %542 = vmatprep.subr.bf16.mxu0 0
    %543 = vmatpush2.bf16.msra.mxu0 %v506
    %544 = vmatprep.subr.bf16.mxu0 0
    %545 = vmatpush2.bf16.msra.mxu0 %v505
    %546 = vmatprep.subr.bf16.mxu0 0
    %547 = vmatpush2.bf16.msra.mxu0 %v504
    %548 = vmatprep.subr.bf16.mxu0 0
    %549 = vmatpush2.bf16.msra.mxu0 %v503
    %550 = vmatprep.subr.bf16.mxu0 0
    %551 = vmatpush2.bf16.msra.mxu0 %v502
    %552 = vmatprep.subr.bf16.mxu0 0
    %553 = vmatpush2.bf16.msra.mxu0 %v501
    %554 = vmatprep.subr.bf16.mxu0 0
    %555 = vmatpush2.bf16.msra.mxu0 %v500
    %556 = vmatprep.mubr.bf16.mxu0 %v394
    %557 = vmatmul.mubr.bf16.gmra.mxu0 %v393
    %v558 = vpop.f32.mrf.mxu0
    %v559 = vadd.f32 %v427, %v558
    %v560 = vpop.f32.mrf.mxu0
    %v561 = vpop.f32.mrf.mxu0
    %v562 = vadd.f32 %v427, %v561
    %v563 = vpop.f32.mrf.mxu0
    %564 = vdwg.mxu0
    %v565 = vmax.f32 %v559, 0.0
    %v566 = vmax.f32 %v562, 0.0
    %v567 = vpack.c.bf16 %v566, %v565
    %v568 = vld [vmem:[%s5] sm:$0xf]
    %v569 = vld [vmem:[%s5 + $0x4] sm:$0xf]
    %v570 = vld [vmem:[%s5 + $0x8] sm:$0xf]
    %v571 = vld [vmem:[%s5 + $0xc] sm:$0xf]
    %v572 = vld [vmem:[%s5 + $0x10] sm:$0xf]
    %v573 = vld [vmem:[%s5 + $0x14] sm:$0xf]
    %v574 = vld [vmem:[%s5 + $0x18] sm:$0xf]
    %v575 = vld [vmem:[%s5 + $0x1c] sm:$0xf]
    %v576 = vld [vmem:[#allocation8 + $0x4] ss:$0 sm:$0xff]
    %v585 = vunpack.c.l.b16 %v568
    %v586 = vunpack.c.l.b16 %v569
    %v587 = vunpack.c.l.b16 %v570
    %v588 = vunpack.c.l.b16 %v571
    %v589 = vunpack.c.l.b16 %v572
    %v590 = vunpack.c.l.b16 %v573
    %v591 = vunpack.c.l.b16 %v574
    %v592 = vunpack.c.l.b16 %v575
    %v593 = vpack.c.b16 %v586, %v585
    %v594 = vpack.c.b16 %v588, %v587
    %v595 = vpack.c.b16 %v590, %v589
    %v596 = vpack.c.b16 %v592, %v591
    %v602 = vsel %vm189, %v567, 0
    %604 = vmatprep.subr.bf16.mxu0 0
    %605 = vmatpush1.bf16.msra.mxu0 0
    %606 = vmatprep.subr.bf16.mxu0 0
    %607 = vmatpush1.bf16.msra.mxu0 0
    %608 = vmatprep.subr.bf16.mxu0 0
    %609 = vmatpush1.bf16.msra.mxu0 0
    %610 = vmatprep.subr.bf16.mxu0 0
    %611 = vmatpush1.bf16.msra.mxu0 0
    %612 = vmatprep.subr.bf16.mxu0 0
    %613 = vmatpush1.bf16.msra.mxu0 %v596
    %614 = vmatprep.subr.bf16.mxu0 0
    %615 = vmatpush1.bf16.msra.mxu0 %v595
    %616 = vmatprep.subr.bf16.mxu0 0
    %617 = vmatpush1.bf16.msra.mxu0 %v594
    %618 = vmatprep.subr.bf16.mxu0 0
    %619 = vmatpush1.bf16.msra.mxu0 %v593
    %620 = vmatprep.subr.bf16.mxu0 0
    %621 = vmatpush2.bf16.msra.mxu0 0
    %622 = vmatprep.subr.bf16.mxu0 0
    %623 = vmatpush2.bf16.msra.mxu0 0
    %624 = vmatprep.subr.bf16.mxu0 0
    %625 = vmatpush2.bf16.msra.mxu0 0
    %626 = vmatprep.subr.bf16.mxu0 0
    %627 = vmatpush2.bf16.msra.mxu0 0
    %628 = vmatprep.subr.bf16.mxu0 0
    %629 = vmatpush2.bf16.msra.mxu0 0
    %630 = vmatprep.subr.bf16.mxu0 0
    %631 = vmatpush2.bf16.msra.mxu0 0
    %632 = vmatprep.subr.bf16.mxu0 0
    %633 = vmatpush2.bf16.msra.mxu0 0
    %634 = vmatprep.subr.bf16.mxu0 0
    %635 = vmatpush2.bf16.msra.mxu0 0
    %636 = vmatprep.mubr.bf16.mxu0 0
    %637 = vmatmul.mubr.bf16.gmra.mxu0 %v602
    %v638 = vpop.f32.mrf.mxu0
    %v639 = vadd.f32 %v576, %v638
    %v640 = vpop.f32.mrf.mxu0
    %v641 = vpop.f32.mrf.mxu0
    %v642 = vadd.f32 %v576, %v641
    %v643 = vpop.f32.mrf.mxu0
    %644 = vdwg.mxu0
    %v645 = vmax.f32 %v639, 0.0
    %v646 = vmax.f32 %v642, 0.0
    %v647 = vpack.c.bf16 %v646, %v645
    %v648 = vld [vmem:[#allocation7] sm:$0xf]
    %v649 = vld [vmem:[#allocation7 + $0x4] sm:$0xf]
    %v650 = vld [vmem:[#allocation7 + $0x8] sm:$0xf]
    %v651 = vld [vmem:[#allocation7 + $0xc] sm:$0xf]
    %v652 = vld [vmem:[#allocation7 + $0x10] sm:$0xf]
    %v653 = vld [vmem:[#allocation7 + $0x14] sm:$0xf]
    %v654 = vld [vmem:[#allocation7 + $0x18] sm:$0xf]
    %v655 = vld [vmem:[#allocation7 + $0x1c] sm:$0xf]
    %v656 = vld [vmem:[#allocation8 + $0x5] ss:$0 sm:$0xff]
    %v665 = vunpack.c.l.b16 %v648
    %v666 = vunpack.c.l.b16 %v649
    %v667 = vunpack.c.l.b16 %v650
    %v668 = vunpack.c.l.b16 %v651
    %v669 = vunpack.c.l.b16 %v652
    %v670 = vunpack.c.l.b16 %v653
    %v671 = vunpack.c.l.b16 %v654
    %v672 = vunpack.c.l.b16 %v655
    %v673 = vpack.c.b16 %v666, %v665
    %v674 = vpack.c.b16 %v668, %v667
    %v675 = vpack.c.b16 %v670, %v669
    %v676 = vpack.c.b16 %v672, %v671
    %v682 = vsel %vm189, %v647, 0
    %684 = vmatprep.subr.bf16.mxu0 0
    %685 = vmatpush1.bf16.msra.mxu0 0
    %686 = vmatprep.subr.bf16.mxu0 0
    %687 = vmatpush1.bf16.msra.mxu0 0
    %688 = vmatprep.subr.bf16.mxu0 0
    %689 = vmatpush1.bf16.msra.mxu0 0
    %690 = vmatprep.subr.bf16.mxu0 0
    %691 = vmatpush1.bf16.msra.mxu0 0
    %692 = vmatprep.subr.bf16.mxu0 0
    %693 = vmatpush1.bf16.msra.mxu0 %v676
    %694 = vmatprep.subr.bf16.mxu0 0
    %695 = vmatpush1.bf16.msra.mxu0 %v675
    %696 = vmatprep.subr.bf16.mxu0 0
    %697 = vmatpush1.bf16.msra.mxu0 %v674
    %698 = vmatprep.subr.bf16.mxu0 0
    %699 = vmatpush1.bf16.msra.mxu0 %v673
    %700 = vmatprep.subr.bf16.mxu0 0
    %701 = vmatpush2.bf16.msra.mxu0 0
    %702 = vmatprep.subr.bf16.mxu0 0
    %703 = vmatpush2.bf16.msra.mxu0 0
    %704 = vmatprep.subr.bf16.mxu0 0
    %705 = vmatpush2.bf16.msra.mxu0 0
    %706 = vmatprep.subr.bf16.mxu0 0
    %707 = vmatpush2.bf16.msra.mxu0 0
    %708 = vmatprep.subr.bf16.mxu0 0
    %709 = vmatpush2.bf16.msra.mxu0 0
    %710 = vmatprep.subr.bf16.mxu0 0
    %711 = vmatpush2.bf16.msra.mxu0 0
    %712 = vmatprep.subr.bf16.mxu0 0
    %713 = vmatpush2.bf16.msra.mxu0 0
    %714 = vmatprep.subr.bf16.mxu0 0
    %715 = vmatpush2.bf16.msra.mxu0 0
    %716 = vmatprep.mubr.bf16.mxu0 0
    %717 = vmatmul.mubr.bf16.gmra.mxu0 %v682
    %v718 = vpop.f32.mrf.mxu0
    %v719 = vadd.f32 %v656, %v718
    %v720 = vpop.f32.mrf.mxu0
    %v721 = vpop.f32.mrf.mxu0
    %v722 = vadd.f32 %v656, %v721
    %v723 = vpop.f32.mrf.mxu0
    %724 = vdwg.mxu0
    %725 = vst [vmem:[#allocation10] sm:$0xff] %v719
    %726 = vst [vmem:[#allocation10 + $0x8] sm:$0xff] %v722
    // Predicated region
    $region50: #{tpu_custom_call.1} parent=1 // pred_check
      _
    $region51: #{tpu_custom_call.1} parent=1 // pred_check_branch
      %728 = sbr.rel (0) target = $region53
    $region52: #{tpu_custom_call.1} parent=1 // pred_region
      %s730 = ssub.s32 256, 256
      %731 = vsyncadd [#allocation4], %s730
      %s732 = sshll.u32 [#allocation10], 4
      %s733 = int_to_ptr.vmem [resolvable:$true] %s732
      %738 = dma.vmem_to_hbm [thread:$0]  %s733, 256, %s8, [#allocation4], 128, 128, 8
    $region53: #{tpu_custom_call.1} parent=1 // pred_fallthru
      _
    // Predicated region
    $region54: #{tpu_custom_call.1} parent=1 // pred_check
      _
    $region55: #{tpu_custom_call.1} parent=1 // pred_check_branch
      %740 = sbr.rel (0) target = $region57
    $region56: #{tpu_custom_call.1} parent=1 // pred_region
      %741 = dma.done [#allocation4], 256
    $region57: #{tpu_custom_call.1} parent=1 // pred_fallthru
      _
    %742 = vsyncpa [#allocation3], 1
    %743 = vsyncpa [#allocation6], 1
    %744 = vsyncpa [#allocation9], 1
    %745 = vsyncpa [#allocation4], 1

</llo_original>
